<compile_context>
chip_gen: v5e
topology: v5e:2x2
jax: 0.10.0
libtpu: 0.0.40
codegen_flags: <defaults>
</compile_context>

<pallas_src>
import math

import jax
import jax.numpy as jnp
from jax.experimental import pallas as pl
from jax.experimental.pallas import tpu as pltpu


def _split_streams_kernel(x_ref, y_ref, z_ref, out_x_ref, out_idx_ref, p_ref):
    """Grid axis 0 tiles the feature dimension of x / out_x.

    The 0/1 row-selection matrix P and out_idx are computed once at step 0;
    every step performs the MXU gather of its feature tile: out_x = P @ x.
    """

    @pl.when(pl.program_id(0) == 0)
    def _build_selection():
        y = y_ref[...]                       # [1, N] int32 (lane-dense)
        z = z_ref[0]                         # scalar int32 (SMEM)
        n = y.shape[-1]

        mask = y == z                        # [1, N] bool
        mask_i = mask.astype(jnp.int32)

        # Inclusive prefix sum of the mask along the lane axis via log2(N)
        # shift+adds (replaces the [N,N] triangular f32 matrix + M=1 matmul).
        prefix = mask_i
        shift = 1
        while shift < n:
            shifted = jnp.concatenate(
                [jnp.zeros((1, shift), jnp.int32), prefix[:, : n - shift]],
                axis=1,
            )
            prefix = prefix + shifted
            shift *= 2

        dest = prefix - 1                    # output slot of each matching src

        # Selection matrix P[slot, src]: 1 iff src is the slot-th match.
        # Integer compares + implicit [1,N] -> [N,N] broadcasting only.
        slot = jax.lax.broadcasted_iota(jnp.int32, (n, n), 0)
        p_sel = (slot == dest) & mask        # [N, N] bool
        p_ref[...] = p_sel.astype(p_ref.dtype)

        # Matching indices compacted to the front, padded with -1: one select
        # + one lane-max (no N^2 multiplies, no separate slot_used pass).
        src = jax.lax.broadcasted_iota(jnp.int32, (n, n), 1)
        out_idx_ref[...] = jnp.max(
            jnp.where(p_sel, src, -1), axis=1, keepdims=True
        )

    # Row gather of this feature tile on the MXU. P is an exact 0/1 matrix and
    # accumulation is f32, so each output row is an exact copy of one x row
    # (rows past the match count are zero).
    out_x_ref[...] = jnp.dot(
        p_ref[...], x_ref[...], preferred_element_type=jnp.float32
    ).astype(out_x_ref.dtype)


def _round_up(v, m):
    return -(-v // m) * m


def split_streams(x, y, z, *, max_feature_tile=512):
    """Pallas equivalent of SplitStreams.forward(x, y, z).

    Returns (x_selected, indices, count): x_selected holds the rows of x whose
    y-label equals z, compacted to the front (zeros afterwards); indices [N]
    holds the matching flat positions of y (padded with -1); count is the
    number of matches (callers slice x_selected[:count] / indices[:count]).
    """
    y_flat = jnp.reshape(y, (-1,)).astype(jnp.int32)
    n = y_flat.shape[0]
    if x.shape[0] != n:
        raise ValueError("x.shape[0] must equal the flattened length of y")

    x2 = x.reshape(n, -1)                    # native dtype, no f32 upcast
    d = x2.shape[1]
    z_arr = jnp.reshape(jnp.asarray(z, dtype=jnp.int32), (1,))

    # Feature tile: full D, or a 128-lane multiple when D can be split evenly
    # (keeps the (8,128) block constraint and lets the pipeline double-buffer
    # the x / out_x tiles behind the P @ x matmul).
    t_d = d
    if n % 8 == 0:
        for cand in (max_feature_tile, 256, 128):
            if cand % 128 == 0 and cand < d and d % cand == 0:
                t_d = cand
                break
    grid = (d // t_d,)

    # P holds exact 0/1 values: bf16 when x is 16-bit (halves the N^2 scratch,
    # native MXU feed), f32 otherwise (exact, no conversion pass).
    p_dtype = (jnp.bfloat16
               if x2.dtype in (jnp.bfloat16, jnp.float16)
               else jnp.float32)
    p_itemsize = 2 if p_dtype == jnp.bfloat16 else 4

    # Scoped-VMEM budget: P scratch + double-buffered x / out_x tiles + slack.
    x_item = x2.dtype.itemsize
    tile_bytes = _round_up(n, 16) * _round_up(t_d, 128) * x_item
    p_bytes = _round_up(n, 16) * _round_up(n, 128) * p_itemsize
    misc_bytes = _round_up(n, 16) * 128 * 4 * 4      # y, idx, iota temporaries
    vmem_limit = int(
        min(64 * 2 ** 20,
            max(16 * 2 ** 20,
                p_bytes + 4 * tile_bytes + misc_bytes + 2 * 2 ** 20)))

    out_x, out_idx = pl.pallas_call(
        _split_streams_kernel,
        out_shape=(
            jax.ShapeDtypeStruct((n, d), x2.dtype),
            jax.ShapeDtypeStruct((n, 1), jnp.int32),
        ),
        grid=grid,
        in_specs=[
            pl.BlockSpec((n, t_d), lambda j: (0, j)),              # x tile
            pl.BlockSpec((1, n), lambda j: (0, 0)),                # y row
            pl.BlockSpec(memory_space=pltpu.MemorySpace.SMEM),     # z scalar
        ],
        out_specs=(
            pl.BlockSpec((n, t_d), lambda j: (0, j)),              # out_x tile
            pl.BlockSpec((n, 1), lambda j: (0, 0)),                # out_idx
        ),
        scratch_shapes=[pltpu.VMEM((n, n), p_dtype)],              # P
        compiler_params=pltpu.CompilerParams(
            dimension_semantics=("arbitrary",),  # P scratch carried across tiles
            vmem_limit_bytes=vmem_limit,
        ),
    )(x2, y_flat.reshape(1, n), z_arr)

    out_x = out_x.reshape((n,) + x.shape[1:])
    out_idx = out_idx.reshape(n)
    count = jnp.sum((out_idx >= 0).astype(jnp.int32))  # count folded into idx
    return out_x, out_idx, count


def _reference(x, y, z):
    """Pure-JAX padded reference for torch's dynamic nonzero + gather."""
    n = x.shape[0]
    x2 = x.reshape(n, -1)
    mask = y.reshape(-1) == z
    idx = jnp.nonzero(mask, size=n, fill_value=-1)[0].astype(jnp.int32)
    safe = jnp.clip(idx, 0, n - 1)
    gathered = jnp.where((idx >= 0)[:, None], x2[safe], 0).astype(x.dtype)
    return gathered.reshape(x.shape), idx, jnp.sum(mask.astype(jnp.int32))


if __name__ == "__main__":
    key = jax.random.PRNGKey(0)

    cases = [
        # (y shape, feature shape, x dtype)
        ((4, 4), (8,), jnp.float32),     # 2-D y exercises y.view(-1)
        ((16,), (256,), jnp.float32),    # feature dim tiled on the grid (2x128)
        ((100,), (8,), jnp.bfloat16),    # N not (8,128)-aligned + bf16 P path
    ]

    for y_shape, feat_shape, dtype in cases:
        key, kx, ky = jax.random.split(key, 3)
        n_rows = math.prod(y_shape)
        x = jax.random.normal(
            kx, (n_rows,) + feat_shape, dtype=jnp.float32).astype(dtype)
        y = jax.random.randint(ky, y_shape, minval=0, maxval=3, dtype=jnp.int32)
        z = jnp.int32(1)

        out_x, out_idx, count = jax.block_until_ready(split_streams(x, y, z))
        ref_x, ref_idx, ref_count = _reference(x, y, z)

        assert int(count) == int(ref_count), (int(count), int(ref_count))
        assert jnp.array_equal(out_idx, ref_idx), (out_idx, ref_idx)
        assert jnp.allclose(out_x.astype(jnp.float32),
                            ref_x.astype(jnp.float32),
                            atol=1e-6, rtol=0.0), "x gather mismatch"

    print("KERNEL_OK")
</pallas_src>

<mosaic_0001>
module attributes {stable_mosaic.version = 11 : i64} {
  func.func @_split_streams_kernel(%arg0: i32, %arg1: memref<16x8xf32, #tpu.memory_space<vmem>>, %arg2: memref<1x16xi32, #tpu.memory_space<vmem>>, %arg3: memref<1xi32, #tpu.memory_space<smem>>, %arg4: memref<16x8xf32, #tpu.memory_space<vmem>>, %arg5: memref<16x1xi32, #tpu.memory_space<vmem>>, %arg6: memref<16x16xf32, #tpu.memory_space<vmem>>) attributes {dimension_semantics = [#tpu.dimension_semantics<arbitrary>], iteration_bounds = array<i64: 1>, scalar_prefetch = 0 : i64, scratch_operands = 1 : i64, tpu.core_type = #tpu.core_type<tc>, window_params = [{transform_indices = @transform_0, window_bounds = array<i64: 16, 8>}, {pipeline_mode = #tpu.pipeline_mode<synchronous>, transform_indices = @transform_1, window_bounds = array<i64: 1, 16>}, {transform_indices = @transform_2, window_bounds = array<i64: 1>}, {transform_indices = @transform_3, window_bounds = array<i64: 16, 8>}, {pipeline_mode = #tpu.pipeline_mode<synchronous>, transform_indices = @transform_4, window_bounds = array<i64: 16, 1>}]} {
    %c0_i32 = arith.constant 0 : i32
    %0 = arith.cmpi eq, %arg0, %c0_i32 : i32
    %1 = arith.extui %0 : i1 to i32
    %c0_i32_0 = arith.constant 0 : i32
    %2 = arith.cmpi ne, %1, %c0_i32_0 : i32
    scf.if %2 {
      %c0_6 = arith.constant 0 : index
      %c0_7 = arith.constant 0 : index
      %7 = vector.load %arg2[%c0_6, %c0_7] : memref<1x16xi32, #tpu.memory_space<vmem>>, vector<1x16xi32>
      %c0_8 = arith.constant 0 : index
      %8 = memref.load %arg3[%c0_8] : memref<1xi32, #tpu.memory_space<smem>>
      %9 = vector.broadcast %8 : i32 to vector<1x16xi32>
      %10 = arith.cmpi eq, %7, %9 : vector<1x16xi32>
      %11 = arith.extui %10 : vector<1x16xi1> to vector<1x16xi32>
      %c0_i32_9 = arith.constant 0 : i32
      %12 = vector.broadcast %c0_i32_9 : i32 to vector<1x1xi32>
      %13 = vector.extract_strided_slice %11 {offsets = [0, 0], sizes = [1, 15], strides = [1, 1]} : vector<1x16xi32> to vector<1x15xi32>
      %14 = tpu.concatenate %12, %13 in 1 : vector<1x1xi32>, vector<1x15xi32> -> vector<1x16xi32>
      %15 = arith.addi %11, %14 : vector<1x16xi32>
      %c0_i32_10 = arith.constant 0 : i32
      %16 = vector.broadcast %c0_i32_10 : i32 to vector<1x2xi32>
      %17 = vector.extract_strided_slice %15 {offsets = [0, 0], sizes = [1, 14], strides = [1, 1]} : vector<1x16xi32> to vector<1x14xi32>
      %18 = tpu.concatenate %16, %17 in 1 : vector<1x2xi32>, vector<1x14xi32> -> vector<1x16xi32>
      %19 = arith.addi %15, %18 : vector<1x16xi32>
      %c0_i32_11 = arith.constant 0 : i32
      %20 = vector.broadcast %c0_i32_11 : i32 to vector<1x4xi32>
      %21 = vector.extract_strided_slice %19 {offsets = [0, 0], sizes = [1, 12], strides = [1, 1]} : vector<1x16xi32> to vector<1x12xi32>
      %22 = tpu.concatenate %20, %21 in 1 : vector<1x4xi32>, vector<1x12xi32> -> vector<1x16xi32>
      %23 = arith.addi %19, %22 : vector<1x16xi32>
      %c0_i32_12 = arith.constant 0 : i32
      %24 = vector.broadcast %c0_i32_12 : i32 to vector<1x8xi32>
      %25 = vector.extract_strided_slice %23 {offsets = [0, 0], sizes = [1, 8], strides = [1, 1]} : vector<1x16xi32> to vector<1x8xi32>
      %26 = tpu.concatenate %24, %25 in 1 : vector<1x8xi32>, vector<1x8xi32> -> vector<1x16xi32>
      %27 = arith.addi %23, %26 : vector<1x16xi32>
      %c1_i32 = arith.constant 1 : i32
      %28 = vector.broadcast %c1_i32 : i32 to vector<1x16xi32>
      %29 = arith.subi %27, %28 : vector<1x16xi32>
      %30 = tpu.iota {dimensions = array<i32: 0>} : vector<16x16xi32>
      %31 = vector.broadcast %29 : vector<1x16xi32> to vector<16x16xi32>
      %32 = arith.cmpi eq, %30, %31 : vector<16x16xi32>
      %33 = vector.broadcast %10 : vector<1x16xi1> to vector<16x16xi1>
      %34 = arith.andi %32, %33 : vector<16x16xi1>
      %35 = arith.extui %34 : vector<16x16xi1> to vector<16x16xi32>
      %36 = arith.sitofp %35 : vector<16x16xi32> to vector<16x16xf32>
      %c0_13 = arith.constant 0 : index
      %c0_14 = arith.constant 0 : index
      %37 = vector.load %arg6[%c0_13, %c0_14] : memref<16x16xf32, #tpu.memory_space<vmem>>, vector<16x16xf32>
      tpu.vector_store %arg6[%c0_13, %c0_14], %36 {strides = array<i32>} : memref<16x16xf32, #tpu.memory_space<vmem>>, vector<16x16xf32>,
      %38 = tpu.iota {dimensions = array<i32: 1>} : vector<16x16xi32>
      %c-1_i32 = arith.constant -1 : i32
      %39 = vector.broadcast %c-1_i32 : i32 to vector<16x16xi32>
      %40 = arith.select %34, %38, %39 : vector<16x16xi1>, vector<16x16xi32>
      %cst_15 = arith.constant dense<-2147483648> : vector<16xi32>
      %41 = vector.multi_reduction <maxsi>, %40, %cst_15 [1] : vector<16x16xi32> to vector<16xi32>
      %42 = vector.shape_cast %41 : vector<16xi32> to vector<16x1xi32>
      %c0_16 = arith.constant 0 : index
      %c0_17 = arith.constant 0 : index
      %43 = vector.load %arg5[%c0_16, %c0_17] : memref<16x1xi32, #tpu.memory_space<vmem>>, vector<16x1xi32>
      tpu.vector_store %arg5[%c0_16, %c0_17], %42 {strides = array<i32>} : memref<16x1xi32, #tpu.memory_space<vmem>>, vector<16x1xi32>,
    } else {
    }
    %c0 = arith.constant 0 : index
    %c0_1 = arith.constant 0 : index
    %3 = vector.load %arg6[%c0, %c0_1] : memref<16x16xf32, #tpu.memory_space<vmem>>, vector<16x16xf32>
    %c0_2 = arith.constant 0 : index
    %c0_3 = arith.constant 0 : index
    %4 = vector.load %arg1[%c0_2, %c0_3] : memref<16x8xf32, #tpu.memory_space<vmem>>, vector<16x8xf32>
    %cst = arith.constant dense<0.000000e+00> : vector<16x8xf32>
    %5 = tpu.matmul %3, %4, %cst {dimension_numbers = #tpu.dot_dimension_numbers<[1], [0], [0], [1], [0, 0, 1, 1], [], []>} : vector<16x16xf32>, vector<16x8xf32>, vector<16x8xf32> -> vector<16x8xf32>
    %c0_4 = arith.constant 0 : index
    %c0_5 = arith.constant 0 : index
    %6 = vector.load %arg4[%c0_4, %c0_5] : memref<16x8xf32, #tpu.memory_space<vmem>>, vector<16x8xf32>
    tpu.vector_store %arg4[%c0_4, %c0_5], %5 {strides = array<i32>} : memref<16x8xf32, #tpu.memory_space<vmem>>, vector<16x8xf32>,
    return
  }
  func.func @transform_0(%arg0: i32) -> (i32, i32) {
    %c0_i32 = arith.constant 0 : i32
    %c0_i32_0 = arith.constant 0 : i32
    return %c0_i32, %arg0 : i32, i32
  }
  func.func @transform_1(%arg0: i32) -> (i32, i32) {
    %c0_i32 = arith.constant 0 : i32
    %c0_i32_0 = arith.constant 0 : i32
    %c0_i32_1 = arith.constant 0 : i32
    return %c0_i32, %c0_i32_0 : i32, i32
  }
  func.func @transform_2(%arg0: i32) -> i32 {
    %c0_i32 = arith.constant 0 : i32
    %c0_i32_0 = arith.constant 0 : i32
    return %c0_i32 : i32
  }
  func.func @transform_3(%arg0: i32) -> (i32, i32) {
    %c0_i32 = arith.constant 0 : i32
    %c0_i32_0 = arith.constant 0 : i32
    return %c0_i32, %arg0 : i32, i32
  }
  func.func @transform_4(%arg0: i32) -> (i32, i32) {
    %c0_i32 = arith.constant 0 : i32
    %c0_i32_0 = arith.constant 0 : i32
    %c0_i32_1 = arith.constant 0 : i32
    return %c0_i32, %c0_i32_0 : i32, i32
  }
}

</mosaic_0001>

<llo_original>
// kernel: tpu_custom_call.1
$region0: #{tpu_custom_call.1}
  #allocation0 [shape = 'u32[]', space=smem, size = 0x4, offset = 0x4, fixed_abs, tag = 'smem constant byte address 0x4 - core index']
  #allocation1 [shape = 'u32[72,128]{1,0:T(1,128)}', space=vmem, size = 0x9000, scoped, tag = 'internal scratch']
  #allocation2 [shape = 'f32[16,16]{1,0:T(8,128)}', space=vmem, size = 0x2000, scoped, tag = 'scratch operand']
  #allocation3 [shape = 's32[1]{0:T(128)S(6)}', space=smem, size = 0x200, scoped, tag = 'scoped memory for tpu_custom_call.1']
  %s0 = inlined_call_operand.vmem [shape: f32[16,8], index: 0, kind: input, shape index: {}]
  %s1 = inlined_call_operand.vmem [shape: s32[1,16], index: 1, kind: input, shape index: {}]
  %s2 = inlined_call_operand.<no memory space> [shape: s32[1], index: 2, kind: input, shape index: {}]
  %s3 = inlined_call_operand.vmem [shape: f32[16,8], index: 3, kind: output, shape index: {0}]
  %s4 = inlined_call_operand.vmem [shape: s32[16,1], index: 4, kind: output, shape index: {1}]
  %5 = xla_tuple %s3, %s4
  %s6 = sld [smem:[#allocation0]]
  $region34: #{tpu_custom_call.1} parent=0
    _
  %s8 = ssub.s32 1, %s6
  %s9 = scalar_select 0, %s8, %s6
  %10 = sst [smem:[#allocation3]] %s2
  // Predicated region
  $region2: #{tpu_custom_call.1} parent=0 // pred_check
    _
  $region3: #{tpu_custom_call.1} parent=0 // pred_check_branch
    %12 = sbr.rel (0) target = $region5
  $region4: #{tpu_custom_call.1} parent=0 // pred_region
    _
  $region5: #{tpu_custom_call.1} parent=0 // pred_fallthru
    _
  // Predicated region
  $region6: #{tpu_custom_call.1} parent=0 // pred_check
    _
  $region7: #{tpu_custom_call.1} parent=0 // pred_check_branch
    %14 = sbr.rel (0) target = $region9
  $region8: #{tpu_custom_call.1} parent=0 // pred_region
    _
  $region9: #{tpu_custom_call.1} parent=0 // pred_fallthru
    _
  // Predicated region
  $region10: #{tpu_custom_call.1} parent=0 // pred_check
    _
  $region11: #{tpu_custom_call.1} parent=0 // pred_check_branch
    %16 = sbr.rel (0) target = $region13
  $region12: #{tpu_custom_call.1} parent=0 // pred_region
    _
  $region13: #{tpu_custom_call.1} parent=0 // pred_fallthru
    _
  %p17 = scmp.eq.s32.totalorder 0, 0
  // Predicated region
  $region14: #{tpu_custom_call.1} parent=0 // pred_check
    %p18 = pneg %p17
  $region15: #{tpu_custom_call.1} parent=0 // pred_check_branch
    %20 = sbr.rel (%p18) target = $region17
  $region16: #{tpu_custom_call.1} parent=0 // pred_region
    %v21 = vld [vmem:[%s1] sm:$0x1]
    %s22 = sld [smem:[#allocation3]]
    %v23 = vstv %s22
    %vm24 = vcmp.eq.s32.totalorder %v21, %v23
    %v25 = vsel %vm24, 1, 0
    %v26 = vperm.slane %v25, 0
    %27 = vrot.lane.b32.xlu0 %v26, 1
    %v28 = vpop.permute.xlu0 %27
    %vm29 = vcmask 7168
    %v30 = vsel %vm29, 0, %v28
    %v31 = vadd.s32 %v25, %v30
    %v32 = vperm.slane %v31, 0
    %33 = vrot.lane.b32.xlu0 %v32, 2
    %v34 = vpop.permute.xlu0 %33
    %vm35 = vcmask 15360
    %v36 = vsel %vm35, 0, %v34
    %v37 = vadd.s32 %v31, %v36
    %v38 = vperm.slane %v37, 0
    %39 = vrot.lane.b32.xlu0 %v38, 4
    %v40 = vpop.permute.xlu0 %39
    %vm41 = vcmask 31744
    %v42 = vsel %vm41, 0, %v40
    %v43 = vadd.s32 %v37, %v42
    %v44 = vperm.slane %v43, 0
    %45 = vrot.lane.b32.xlu0 %v44, 8
    %v46 = vpop.permute.xlu0 %45
    %vm47 = vcmask 64512
    %v48 = vsel %vm47, 0, %v46
    %v49 = vadd.s32 %v43, %v48
    %v50 = vsub.s32 %v49, 1
    %v51 = vlaneseq
    %v52 = vshrl.u32 %v51, 7
    %v53 = vadd.s32 %v52, 8
    %v54 = vperm.slane %v50, 0
    %vm55 = vcmp.eq.s32.totalorder %v52, %v54
    %vm56 = vcmp.eq.s32.totalorder %v53, %v54
    %vm57 = vcmp.eq.s32.totalorder %v26, 1
    %vm58 = vmand %vm55, %vm57
    %vm59 = vmand %vm56, %vm57
    %v60 = vsel %vm58, 1, 0
    %v61 = vsel %vm59, 1, 0
    %v62 = vcvt.s32.f32 %v60
    %v63 = vcvt.s32.f32 %v61
    %vm64 = vcmask 130048
    %65 = vst.msk [vmem:[#allocation2] sm:$0xff] %vm64, %v62
    %66 = vst.msk [vmem:[#allocation2 + $0x8] sm:$0xff] %vm64, %v63
    %v67 = vlaneseq
    %v68 = vand.u32 %v67, 127
    %v69 = vsel %vm58, %v68, 4294967295
    %v70 = vsel %vm59, %v68, 4294967295
    %v71 = vsel %vm64, %v69, 2147483648
    %v72 = vand.u32 %v71, 65535
    %v73 = vshra.s32 %v71, 16
    %v74 = vcvt.s32.f32 %v72
    %v75 = vcvt.s32.f32 %v73
    %76 = vmax.xlane.f32.xlu0 %v75
    %v77 = vpop.xlane.xlu0 %76
    %vm78 = vcmp.eq.f32.partialorder %v75, %v77
    %v79 = vsel %vm78, %v74, -inf
    %80 = vmax.xlane.f32.xlu0 %v79
    %v81 = vpop.xlane.xlu0 %80
    %v82 = vcvt.f32.s32 %v81
    %v83 = vcvt.f32.s32 %v77
    %v84 = vshll.u32 %v83, 16
    %v85 = vadd.s32 %v84, %v82
    %v86 = vsel %vm64, %v70, 2147483648
    %v87 = vand.u32 %v86, 65535
    %v88 = vshra.s32 %v86, 16
    %v89 = vcvt.s32.f32 %v87
    %v90 = vcvt.s32.f32 %v88
    %91 = vmax.xlane.f32.xlu0 %v90
    %v92 = vpop.xlane.xlu0 %91
    %vm93 = vcmp.eq.f32.partialorder %v90, %v92
    %v94 = vsel %vm93, %v89, -inf
    %95 = vmax.xlane.f32.xlu0 %v94
    %v96 = vpop.xlane.xlu0 %95
    %v97 = vcvt.f32.s32 %v96
    %v98 = vcvt.f32.s32 %v92
    %v99 = vshll.u32 %v98, 16
    %v100 = vadd.s32 %v99, %v97
    %101 = vst.msk [vmem:[%s4] sm:$0xff] %vm29, %v85
    %102 = vst.msk [vmem:[%s4 + $0x8] sm:$0xff] %vm29, %v100
  $region17: #{tpu_custom_call.1} parent=0 // pred_fallthru
    _
  %v103 = vld [vmem:[#allocation2] sm:$0xff]
  %v104 = vld [vmem:[#allocation2 + $0x8] sm:$0xff]
  %v105 = vld [vmem:[%s0] sm:$0xff]
  %v106 = vld [vmem:[%s0 + $0x8] sm:$0xff]
  %vm107 = vcmask 130048
  %v109 = vsel %vm107, %v103, 0
  %v112 = vsel %vm107, %v104, 0
  %114 = vmatpush.msra.mxu0 0.0
  %115 = vmatpush.msra.mxu0 0.0
  %116 = vmatpush.msra.mxu0 0.0
  %117 = vmatpush.msra.mxu0 0.0
  %118 = vmatpush.msra.mxu0 0.0
  %119 = vmatpush.msra.mxu0 0.0
  %120 = vmatpush.msra.mxu0 0.0
  %121 = vmatpush.msra.mxu0 0.0
  %122 = vmatpush.msra.mxu0 0.0
  %123 = vmatpush.msra.mxu0 0.0
  %124 = vmatpush.msra.mxu0 0.0
  %125 = vmatpush.msra.mxu0 0.0
  %126 = vmatpush.msra.mxu0 0.0
  %127 = vmatpush.msra.mxu0 0.0
  %128 = vmatpush.msra.mxu0 %v106
  %129 = vmatpush.msra.mxu0 %v105
  %130 = vmatmul.f32.gmra.mxu0 %v109
  %v131 = vpop.f32.mrf.mxu0
  %v132 = vadd.f32 0.0, %v131
  %133 = vmatmul.f32.gmra.mxu0 %v112
  %v134 = vpop.f32.mrf.mxu0
  %v135 = vadd.f32 0.0, %v134
  %136 = vdwg.mxu0
  %vm137 = vcmask 64512
  %138 = vst.msk [vmem:[%s3] sm:$0xff] %vm137, %v132
  %139 = vst.msk [vmem:[%s3 + $0x8] sm:$0xff] %vm137, %v135
  // Predicated region
  $region18: #{tpu_custom_call.1} parent=0 // pred_check
    _
  $region19: #{tpu_custom_call.1} parent=0 // pred_check_branch
    %141 = sbr.rel (0) target = $region21
  $region20: #{tpu_custom_call.1} parent=0 // pred_region
    _
  $region21: #{tpu_custom_call.1} parent=0 // pred_fallthru
    _
  // Predicated region
  $region22: #{tpu_custom_call.1} parent=0 // pred_check
    _
  $region23: #{tpu_custom_call.1} parent=0 // pred_check_branch
    %143 = sbr.rel (0) target = $region25
  $region24: #{tpu_custom_call.1} parent=0 // pred_region
    _
  $region25: #{tpu_custom_call.1} parent=0 // pred_fallthru
    _
  // Predicated region
  $region26: #{tpu_custom_call.1} parent=0 // pred_check
    _
  $region27: #{tpu_custom_call.1} parent=0 // pred_check_branch
    %145 = sbr.rel (0) target = $region29
  $region28: #{tpu_custom_call.1} parent=0 // pred_region
    _
  $region29: #{tpu_custom_call.1} parent=0 // pred_fallthru
    _
  // Predicated region
  $region30: #{tpu_custom_call.1} parent=0 // pred_check
    _
  $region31: #{tpu_custom_call.1} parent=0 // pred_check_branch
    %147 = sbr.rel (0) target = $region33
  $region32: #{tpu_custom_call.1} parent=0 // pred_region
    _
  $region33: #{tpu_custom_call.1} parent=0 // pred_fallthru
    _

</llo_original>
